<compile_context>
chip_gen: v7x
topology: tpu7x:2x2x1
jax: 0.10.0
libtpu: 0.0.40
codegen_flags: <defaults>
</compile_context>

<pallas_src>
import jax
import jax.numpy as jnp
from jax.experimental import pallas as pl
from jax.experimental.pallas import tpu as pltpu

L = 128            # linear_size (shrunk from 512 for a small example)
NUM_STAGE = 3
IN_SIZE = 68       # stereo_size / input_size
OUT_FIN = 1        # output_size(2) - 1
BN_EPS = 1e-5
MAX_TB = 128       # batch tile cap

# Packed-parameter plan (shared by builder, kernel and references):
#   w_in  : (IN_SIZE, L)  bf16   folded w1 (w1 * bn1 scale)
#   w_big : (8, L, L)     bf16   [2i] stage-i w1, [2i+1] stage-i w2 (BN folded),
#                                [6] w2 (plain), [7] w3 (bn3 folded)
#   vecs  : (9, L)        f32    folded biases: 0 b1, 1+2i/2+2i stage-i, 7 b2, 8 b3
#   w_aux : (L, 1) bf16   b_aux : (1, 1) f32
#   w_fin : (L, OUT_FIN) bf16    b_fin : (1, OUT_FIN) f32


def simple_kernel(x_ref, w_in_ref, w_big_ref, vecs_ref,
                  w_aux_ref, b_aux_ref, w_fin_ref, b_fin_ref, out_ref):
    x = x_ref[...].astype(jnp.bfloat16)

    def vec(i):
        return vecs_ref[i:i + 1, :]                        # (1, L) f32

    def lin(y, wi, bi):                                    # y: (TB, L) f32
        return jnp.dot(y.astype(jnp.bfloat16), w_big_ref[wi],
                       preferred_element_type=jnp.float32) + vec(bi)

    def lin_relu(y, wi, bi):
        return jnp.maximum(lin(y, wi, bi), 0.0)

    # w1 + bn1 + relu (dropout = identity in eval mode)
    y = jnp.dot(x, w_in_ref[...], preferred_element_type=jnp.float32) + vec(0)
    y = jnp.maximum(y, 0.0)

    # residual stages (MyLinearSimple)
    for i in range(NUM_STAGE):
        z = lin_relu(y, 2 * i, 1 + 2 * i)
        z = lin_relu(z, 2 * i + 1, 2 + 2 * i)
        y = y + z

    # w2 (plain linear, no BN / relu)
    y = lin(y, 2 * NUM_STAGE, 1 + 2 * NUM_STAGE)

    # aux head (computed on the w2 output, as in the PyTorch forward)
    aux = jnp.dot(y.astype(jnp.bfloat16), w_aux_ref[...],
                  preferred_element_type=jnp.float32) + b_aux_ref[...]

    # w3 + bn3 + relu (folded)
    y = lin_relu(y, 2 * NUM_STAGE + 1, 2 + 2 * NUM_STAGE)

    # final linear
    y_fin = jnp.dot(y.astype(jnp.bfloat16), w_fin_ref[...],
                    preferred_element_type=jnp.float32) + b_fin_ref[...]

    # single store for the concatenated (y_fin, aux) output
    out_ref[...] = jnp.concatenate([y_fin, aux], axis=1).astype(out_ref.dtype)


def _full_spec(arr):
    nd = arr.ndim
    return pl.BlockSpec(arr.shape, lambda i, _nd=nd: (0,) * _nd)


def simple_forward(x, params):
    w_in, w_big, vecs, w_aux, b_aux, w_fin, b_fin = params
    B = x.shape[0]
    TB = B if B <= MAX_TB else MAX_TB
    pad = (-B) % TB
    if pad:
        x = jnp.pad(x, ((0, pad), (0, 0)))
    Bp = B + pad

    out = pl.pallas_call(
        simple_kernel,
        out_shape=jax.ShapeDtypeStruct((Bp, 2), jnp.float32),
        grid_spec=pltpu.PrefetchScalarGridSpec(
            num_scalar_prefetch=0,
            grid=(pl.cdiv(Bp, TB),),
            in_specs=[
                pl.BlockSpec((TB, IN_SIZE), lambda i: (i, 0)),
                _full_spec(w_in),
                _full_spec(w_big),
                _full_spec(vecs),
                _full_spec(w_aux),
                _full_spec(b_aux),
                _full_spec(w_fin),
                _full_spec(b_fin),
            ],
            out_specs=pl.BlockSpec((TB, 2), lambda i: (i, 0)),
        ),
        compiler_params=pltpu.CompilerParams(
            dimension_semantics=("parallel",)),   # shards batch tiles on v7x
    )(x, w_in, w_big, vecs, w_aux, b_aux, w_fin, b_fin)
    return out[:B]


# ----------------------------------------------------------------------------
# Deterministic parameter construction (raw PyTorch-style params + packing)
# ----------------------------------------------------------------------------
def init_raw_params(key):
    keys = iter(jax.random.split(key, 128))

    def nrm(shape, scale=0.05):
        return scale * jax.random.normal(next(keys), shape, dtype=jnp.float32)

    def bn():
        gamma = 1.0 + nrm((L,), 0.1)
        beta = nrm((L,), 0.1)
        mean = nrm((L,), 0.1)
        var = 1.0 + jnp.abs(nrm((L,), 0.1))
        return gamma, beta, mean, var

    raw = {
        "w1": nrm((IN_SIZE, L)), "b1": nrm((L,)), "bn1": bn(),
        "stages": [],
        "w2": nrm((L, L)), "b2": nrm((L,)),
        "w3": nrm((L, L)), "b3": nrm((L,)), "bn3": bn(),
        "w_aux": nrm((L, 1)), "b_aux": nrm((1,)),
        "w_fin": nrm((L, OUT_FIN)), "b_fin": nrm((OUT_FIN,)),
    }
    for _ in range(NUM_STAGE):
        raw["stages"].append({
            "wa": nrm((L, L)), "ba": nrm((L,)), "bna": bn(),
            "wb": nrm((L, L)), "bb": nrm((L,)), "bnb": bn(),
        })
    return raw


def _fold(w, b, bn_p):
    gamma, beta, mean, var = bn_p
    s = gamma / jnp.sqrt(var + BN_EPS)
    t = beta - mean * s
    return w * s[None, :], b * s + t


def pack_params(raw):
    w_in, b_in = _fold(raw["w1"], raw["b1"], raw["bn1"])
    w_big, vecs = [], [b_in]
    for st in raw["stages"]:
        wa, ba = _fold(st["wa"], st["ba"], st["bna"])
        wb, bb = _fold(st["wb"], st["bb"], st["bnb"])
        w_big.extend([wa, wb])
        vecs.extend([ba, bb])
    w_big.append(raw["w2"]); vecs.append(raw["b2"])
    w3, b3 = _fold(raw["w3"], raw["b3"], raw["bn3"])
    w_big.append(w3); vecs.append(b3)

    w_big = jnp.stack(w_big, axis=0).astype(jnp.bfloat16)   # (8, L, L)
    vecs = jnp.stack(vecs, axis=0)                          # (9, L) f32
    assert w_big.shape == (2 * NUM_STAGE + 2, L, L)
    assert vecs.shape == (2 * NUM_STAGE + 3, L)
    return (w_in.astype(jnp.bfloat16),
            w_big,
            vecs,
            raw["w_aux"].astype(jnp.bfloat16),
            raw["b_aux"].reshape(1, 1),
            raw["w_fin"].astype(jnp.bfloat16),
            raw["b_fin"].reshape(1, OUT_FIN))


# ----------------------------------------------------------------------------
# References
# ----------------------------------------------------------------------------
def reference_forward_raw(x, raw):
    """Pure-JAX f32 mirror of the PyTorch eval-mode forward (unfolded BN)."""
    def bn(y, p):
        g, b, m, v = p
        return (y - m) / jnp.sqrt(v + BN_EPS) * g + b

    y = jnp.maximum(bn(x @ raw["w1"] + raw["b1"], raw["bn1"]), 0.0)
    for st in raw["stages"]:
        z = jnp.maximum(bn(y @ st["wa"] + st["ba"], st["bna"]), 0.0)
        z = jnp.maximum(bn(z @ st["wb"] + st["bb"], st["bnb"]), 0.0)
        y = y + z
    y = y @ raw["w2"] + raw["b2"]
    aux = y @ raw["w_aux"] + raw["b_aux"]
    y = jnp.maximum(bn(y @ raw["w3"] + raw["b3"], raw["bn3"]), 0.0)
    y_fin = y @ raw["w_fin"] + raw["b_fin"]
    return jnp.concatenate([y_fin, aux], axis=1)


def reference_forward_packed(x, params):
    """Pure-JAX forward with the same folded bf16 weights the kernel uses."""
    w_in, w_big, vecs, w_aux, b_aux, w_fin, b_fin = params

    def dot(a, w):
        return jnp.dot(a.astype(jnp.bfloat16), w,
                       preferred_element_type=jnp.float32)

    def vec(i):
        return vecs[i:i + 1, :]

    y = jnp.maximum(dot(x, w_in) + vec(0), 0.0)
    for i in range(NUM_STAGE):
        z = jnp.maximum(dot(y, w_big[2 * i]) + vec(1 + 2 * i), 0.0)
        z = jnp.maximum(dot(z, w_big[2 * i + 1]) + vec(2 + 2 * i), 0.0)
        y = y + z
    y = dot(y, w_big[2 * NUM_STAGE]) + vec(1 + 2 * NUM_STAGE)
    aux = dot(y, w_aux) + b_aux
    y = jnp.maximum(dot(y, w_big[2 * NUM_STAGE + 1]) + vec(2 + 2 * NUM_STAGE), 0.0)
    y_fin = dot(y, w_fin) + b_fin
    return jnp.concatenate([y_fin, aux], axis=1)


if __name__ == "__main__":
    key = jax.random.PRNGKey(0)
    k_x, k_p = jax.random.split(key)

    B = 8
    x = jax.random.normal(k_x, (B, IN_SIZE), dtype=jnp.float32)
    raw = init_raw_params(k_p)
    params = pack_params(raw)

    # TODO(synk): train-mode Dropout RNG and batch-statistics BatchNorm are not
    # implemented; this kernel reproduces the eval-mode forward pass.
    out = simple_forward(x, params)
    out = jax.block_until_ready(out)
    assert out.shape == (B, 2)

    # Tight check against a pure-JAX forward using the identical packed bf16
    # weights (isolates Pallas-vs-XLA numerics).
    ref_packed = reference_forward_packed(x, params)
    assert jnp.allclose(out, ref_packed, rtol=5e-3, atol=5e-3), (out, ref_packed)

    # Loose check against the exact f32, unfolded eval-mode forward (validates
    # the BN/bias folding; drift comes only from bf16 weight rounding).
    ref_raw = reference_forward_raw(x, raw)
    assert jnp.allclose(out, ref_raw, rtol=5e-2, atol=5e-2), (out, ref_raw)

    print("KERNEL_OK")
</pallas_src>

<mosaic_0001>
module attributes {stable_mosaic.version = 11 : i64} {
  func.func @simple_kernel(%arg0: i32, %arg1: memref<8x68xf32, #tpu.memory_space<vmem>>, %arg2: memref<68x128xbf16, #tpu.memory_space<vmem>>, %arg3: memref<8x128x128xbf16, #tpu.memory_space<vmem>>, %arg4: memref<9x128xf32, #tpu.memory_space<vmem>>, %arg5: memref<128x1xbf16, #tpu.memory_space<vmem>>, %arg6: memref<1x1xf32, #tpu.memory_space<vmem>>, %arg7: memref<128x1xbf16, #tpu.memory_space<vmem>>, %arg8: memref<1x1xf32, #tpu.memory_space<vmem>>, %arg9: memref<8x2xf32, #tpu.memory_space<vmem>>) attributes {dimension_semantics = [#tpu.dimension_semantics<parallel>], iteration_bounds = array<i64: 1>, scalar_prefetch = 0 : i64, scratch_operands = 0 : i64, tpu.core_type = #tpu.core_type<tc>, window_params = [{transform_indices = @transform_0, window_bounds = array<i64: 8, 68>}, {pipeline_mode = #tpu.pipeline_mode<synchronous>, transform_indices = @transform_1, window_bounds = array<i64: 68, 128>}, {pipeline_mode = #tpu.pipeline_mode<synchronous>, transform_indices = @transform_2, window_bounds = array<i64: 8, 128, 128>}, {pipeline_mode = #tpu.pipeline_mode<synchronous>, transform_indices = @transform_3, window_bounds = array<i64: 9, 128>}, {pipeline_mode = #tpu.pipeline_mode<synchronous>, transform_indices = @transform_4, window_bounds = array<i64: 128, 1>}, {pipeline_mode = #tpu.pipeline_mode<synchronous>, transform_indices = @transform_5, window_bounds = array<i64: 1, 1>}, {pipeline_mode = #tpu.pipeline_mode<synchronous>, transform_indices = @transform_6, window_bounds = array<i64: 128, 1>}, {pipeline_mode = #tpu.pipeline_mode<synchronous>, transform_indices = @transform_7, window_bounds = array<i64: 1, 1>}, {transform_indices = @transform_8, window_bounds = array<i64: 8, 2>}]} {
    %c0 = arith.constant 0 : index
    %c0_0 = arith.constant 0 : index
    %0 = vector.load %arg1[%c0, %c0_0] : memref<8x68xf32, #tpu.memory_space<vmem>>, vector<8x68xf32>
    %1 = arith.truncf %0 : vector<8x68xf32> to vector<8x68xbf16>
    %c0_1 = arith.constant 0 : index
    %c0_2 = arith.constant 0 : index
    %2 = vector.load %arg2[%c0_1, %c0_2] : memref<68x128xbf16, #tpu.memory_space<vmem>>, vector<68x128xbf16>
    %cst = arith.constant dense<0.000000e+00> : vector<8x128xf32>
    %3 = tpu.matmul %1, %2, %cst {dimension_numbers = #tpu.dot_dimension_numbers<[1], [0], [0], [1], [0, 0, 1, 1], [], []>} : vector<8x68xbf16>, vector<68x128xbf16>, vector<8x128xf32> -> vector<8x128xf32>
    %c0_3 = arith.constant 0 : index
    %c0_4 = arith.constant 0 : index
    %4 = vector.load %arg4[%c0_3, %c0_4] : memref<9x128xf32, #tpu.memory_space<vmem>>, vector<1x128xf32>
    %5 = vector.broadcast %4 : vector<1x128xf32> to vector<8x128xf32>
    %6 = arith.addf %3, %5 : vector<8x128xf32>
    %cst_5 = arith.constant 0.000000e+00 : f32
    %7 = vector.broadcast %cst_5 : f32 to vector<8x128xf32>
    %8 = arith.maximumf %6, %7 : vector<8x128xf32>
    %9 = arith.truncf %8 : vector<8x128xf32> to vector<8x128xbf16>
    %c0_6 = arith.constant 0 : index
    %c0_7 = arith.constant 0 : index
    %c0_8 = arith.constant 0 : index
    %10 = vector.load %arg3[%c0_6, %c0_7, %c0_8] : memref<8x128x128xbf16, #tpu.memory_space<vmem>>, vector<1x128x128xbf16>
    %11 = vector.shape_cast %10 : vector<1x128x128xbf16> to vector<128x128xbf16>
    %cst_9 = arith.constant dense<0.000000e+00> : vector<8x128xf32>
    %12 = tpu.matmul %9, %11, %cst_9 {dimension_numbers = #tpu.dot_dimension_numbers<[1], [0], [0], [1], [0, 0, 1, 1], [], []>} : vector<8x128xbf16>, vector<128x128xbf16>, vector<8x128xf32> -> vector<8x128xf32>
    %c1 = arith.constant 1 : index
    %c0_10 = arith.constant 0 : index
    %13 = vector.load %arg4[%c1, %c0_10] : memref<9x128xf32, #tpu.memory_space<vmem>>, vector<1x128xf32>
    %14 = vector.broadcast %13 : vector<1x128xf32> to vector<8x128xf32>
    %15 = arith.addf %12, %14 : vector<8x128xf32>
    %cst_11 = arith.constant 0.000000e+00 : f32
    %16 = vector.broadcast %cst_11 : f32 to vector<8x128xf32>
    %17 = arith.maximumf %15, %16 : vector<8x128xf32>
    %18 = arith.truncf %17 : vector<8x128xf32> to vector<8x128xbf16>
    %c1_12 = arith.constant 1 : index
    %c0_13 = arith.constant 0 : index
    %c0_14 = arith.constant 0 : index
    %19 = vector.load %arg3[%c1_12, %c0_13, %c0_14] : memref<8x128x128xbf16, #tpu.memory_space<vmem>>, vector<1x128x128xbf16>
    %20 = vector.shape_cast %19 : vector<1x128x128xbf16> to vector<128x128xbf16>
    %cst_15 = arith.constant dense<0.000000e+00> : vector<8x128xf32>
    %21 = tpu.matmul %18, %20, %cst_15 {dimension_numbers = #tpu.dot_dimension_numbers<[1], [0], [0], [1], [0, 0, 1, 1], [], []>} : vector<8x128xbf16>, vector<128x128xbf16>, vector<8x128xf32> -> vector<8x128xf32>
    %c2 = arith.constant 2 : index
    %c0_16 = arith.constant 0 : index
    %22 = vector.load %arg4[%c2, %c0_16] : memref<9x128xf32, #tpu.memory_space<vmem>>, vector<1x128xf32>
    %23 = vector.broadcast %22 : vector<1x128xf32> to vector<8x128xf32>
    %24 = arith.addf %21, %23 : vector<8x128xf32>
    %cst_17 = arith.constant 0.000000e+00 : f32
    %25 = vector.broadcast %cst_17 : f32 to vector<8x128xf32>
    %26 = arith.maximumf %24, %25 : vector<8x128xf32>
    %27 = arith.addf %8, %26 : vector<8x128xf32>
    %28 = arith.truncf %27 : vector<8x128xf32> to vector<8x128xbf16>
    %c2_18 = arith.constant 2 : index
    %c0_19 = arith.constant 0 : index
    %c0_20 = arith.constant 0 : index
    %29 = vector.load %arg3[%c2_18, %c0_19, %c0_20] : memref<8x128x128xbf16, #tpu.memory_space<vmem>>, vector<1x128x128xbf16>
    %30 = vector.shape_cast %29 : vector<1x128x128xbf16> to vector<128x128xbf16>
    %cst_21 = arith.constant dense<0.000000e+00> : vector<8x128xf32>
    %31 = tpu.matmul %28, %30, %cst_21 {dimension_numbers = #tpu.dot_dimension_numbers<[1], [0], [0], [1], [0, 0, 1, 1], [], []>} : vector<8x128xbf16>, vector<128x128xbf16>, vector<8x128xf32> -> vector<8x128xf32>
    %c3 = arith.constant 3 : index
    %c0_22 = arith.constant 0 : index
    %32 = vector.load %arg4[%c3, %c0_22] : memref<9x128xf32, #tpu.memory_space<vmem>>, vector<1x128xf32>
    %33 = vector.broadcast %32 : vector<1x128xf32> to vector<8x128xf32>
    %34 = arith.addf %31, %33 : vector<8x128xf32>
    %cst_23 = arith.constant 0.000000e+00 : f32
    %35 = vector.broadcast %cst_23 : f32 to vector<8x128xf32>
    %36 = arith.maximumf %34, %35 : vector<8x128xf32>
    %37 = arith.truncf %36 : vector<8x128xf32> to vector<8x128xbf16>
    %c3_24 = arith.constant 3 : index
    %c0_25 = arith.constant 0 : index
    %c0_26 = arith.constant 0 : index
    %38 = vector.load %arg3[%c3_24, %c0_25, %c0_26] : memref<8x128x128xbf16, #tpu.memory_space<vmem>>, vector<1x128x128xbf16>
    %39 = vector.shape_cast %38 : vector<1x128x128xbf16> to vector<128x128xbf16>
    %cst_27 = arith.constant dense<0.000000e+00> : vector<8x128xf32>
    %40 = tpu.matmul %37, %39, %cst_27 {dimension_numbers = #tpu.dot_dimension_numbers<[1], [0], [0], [1], [0, 0, 1, 1], [], []>} : vector<8x128xbf16>, vector<128x128xbf16>, vector<8x128xf32> -> vector<8x128xf32>
    %c4 = arith.constant 4 : index
    %c0_28 = arith.constant 0 : index
    %41 = vector.load %arg4[%c4, %c0_28] : memref<9x128xf32, #tpu.memory_space<vmem>>, vector<1x128xf32>
    %42 = vector.broadcast %41 : vector<1x128xf32> to vector<8x128xf32>
    %43 = arith.addf %40, %42 : vector<8x128xf32>
    %cst_29 = arith.constant 0.000000e+00 : f32
    %44 = vector.broadcast %cst_29 : f32 to vector<8x128xf32>
    %45 = arith.maximumf %43, %44 : vector<8x128xf32>
    %46 = arith.addf %27, %45 : vector<8x128xf32>
    %47 = arith.truncf %46 : vector<8x128xf32> to vector<8x128xbf16>
    %c4_30 = arith.constant 4 : index
    %c0_31 = arith.constant 0 : index
    %c0_32 = arith.constant 0 : index
    %48 = vector.load %arg3[%c4_30, %c0_31, %c0_32] : memref<8x128x128xbf16, #tpu.memory_space<vmem>>, vector<1x128x128xbf16>
    %49 = vector.shape_cast %48 : vector<1x128x128xbf16> to vector<128x128xbf16>
    %cst_33 = arith.constant dense<0.000000e+00> : vector<8x128xf32>
    %50 = tpu.matmul %47, %49, %cst_33 {dimension_numbers = #tpu.dot_dimension_numbers<[1], [0], [0], [1], [0, 0, 1, 1], [], []>} : vector<8x128xbf16>, vector<128x128xbf16>, vector<8x128xf32> -> vector<8x128xf32>
    %c5 = arith.constant 5 : index
    %c0_34 = arith.constant 0 : index
    %51 = vector.load %arg4[%c5, %c0_34] : memref<9x128xf32, #tpu.memory_space<vmem>>, vector<1x128xf32>
    %52 = vector.broadcast %51 : vector<1x128xf32> to vector<8x128xf32>
    %53 = arith.addf %50, %52 : vector<8x128xf32>
    %cst_35 = arith.constant 0.000000e+00 : f32
    %54 = vector.broadcast %cst_35 : f32 to vector<8x128xf32>
    %55 = arith.maximumf %53, %54 : vector<8x128xf32>
    %56 = arith.truncf %55 : vector<8x128xf32> to vector<8x128xbf16>
    %c5_36 = arith.constant 5 : index
    %c0_37 = arith.constant 0 : index
    %c0_38 = arith.constant 0 : index
    %57 = vector.load %arg3[%c5_36, %c0_37, %c0_38] : memref<8x128x128xbf16, #tpu.memory_space<vmem>>, vector<1x128x128xbf16>
    %58 = vector.shape_cast %57 : vector<1x128x128xbf16> to vector<128x128xbf16>
    %cst_39 = arith.constant dense<0.000000e+00> : vector<8x128xf32>
    %59 = tpu.matmul %56, %58, %cst_39 {dimension_numbers = #tpu.dot_dimension_numbers<[1], [0], [0], [1], [0, 0, 1, 1], [], []>} : vector<8x128xbf16>, vector<128x128xbf16>, vector<8x128xf32> -> vector<8x128xf32>
    %c6 = arith.constant 6 : index
    %c0_40 = arith.constant 0 : index
    %60 = vector.load %arg4[%c6, %c0_40] : memref<9x128xf32, #tpu.memory_space<vmem>>, vector<1x128xf32>
    %61 = vector.broadcast %60 : vector<1x128xf32> to vector<8x128xf32>
    %62 = arith.addf %59, %61 : vector<8x128xf32>
    %cst_41 = arith.constant 0.000000e+00 : f32
    %63 = vector.broadcast %cst_41 : f32 to vector<8x128xf32>
    %64 = arith.maximumf %62, %63 : vector<8x128xf32>
    %65 = arith.addf %46, %64 : vector<8x128xf32>
    %66 = arith.truncf %65 : vector<8x128xf32> to vector<8x128xbf16>
    %c6_42 = arith.constant 6 : index
    %c0_43 = arith.constant 0 : index
    %c0_44 = arith.constant 0 : index
    %67 = vector.load %arg3[%c6_42, %c0_43, %c0_44] : memref<8x128x128xbf16, #tpu.memory_space<vmem>>, vector<1x128x128xbf16>
    %68 = vector.shape_cast %67 : vector<1x128x128xbf16> to vector<128x128xbf16>
    %cst_45 = arith.constant dense<0.000000e+00> : vector<8x128xf32>
    %69 = tpu.matmul %66, %68, %cst_45 {dimension_numbers = #tpu.dot_dimension_numbers<[1], [0], [0], [1], [0, 0, 1, 1], [], []>} : vector<8x128xbf16>, vector<128x128xbf16>, vector<8x128xf32> -> vector<8x128xf32>
    %c7 = arith.constant 7 : index
    %c0_46 = arith.constant 0 : index
    %70 = vector.load %arg4[%c7, %c0_46] : memref<9x128xf32, #tpu.memory_space<vmem>>, vector<1x128xf32>
    %71 = vector.broadcast %70 : vector<1x128xf32> to vector<8x128xf32>
    %72 = arith.addf %69, %71 : vector<8x128xf32>
    %73 = arith.truncf %72 : vector<8x128xf32> to vector<8x128xbf16>
    %c0_47 = arith.constant 0 : index
    %c0_48 = arith.constant 0 : index
    %74 = vector.load %arg5[%c0_47, %c0_48] : memref<128x1xbf16, #tpu.memory_space<vmem>>, vector<128x1xbf16>
    %cst_49 = arith.constant dense<0.000000e+00> : vector<8x1xf32>
    %75 = tpu.matmul %73, %74, %cst_49 {dimension_numbers = #tpu.dot_dimension_numbers<[1], [0], [0], [1], [0, 0, 1, 1], [], []>} : vector<8x128xbf16>, vector<128x1xbf16>, vector<8x1xf32> -> vector<8x1xf32>
    %c0_50 = arith.constant 0 : index
    %c0_51 = arith.constant 0 : index
    %76 = vector.load %arg6[%c0_50, %c0_51] : memref<1x1xf32, #tpu.memory_space<vmem>>, vector<1x1xf32>
    %77 = vector.broadcast %76 : vector<1x1xf32> to vector<8x1xf32>
    %78 = arith.addf %75, %77 : vector<8x1xf32>
    %79 = arith.truncf %72 : vector<8x128xf32> to vector<8x128xbf16>
    %c7_52 = arith.constant 7 : index
    %c0_53 = arith.constant 0 : index
    %c0_54 = arith.constant 0 : index
    %80 = vector.load %arg3[%c7_52, %c0_53, %c0_54] : memref<8x128x128xbf16, #tpu.memory_space<vmem>>, vector<1x128x128xbf16>
    %81 = vector.shape_cast %80 : vector<1x128x128xbf16> to vector<128x128xbf16>
    %cst_55 = arith.constant dense<0.000000e+00> : vector<8x128xf32>
    %82 = tpu.matmul %79, %81, %cst_55 {dimension_numbers = #tpu.dot_dimension_numbers<[1], [0], [0], [1], [0, 0, 1, 1], [], []>} : vector<8x128xbf16>, vector<128x128xbf16>, vector<8x128xf32> -> vector<8x128xf32>
    %c8 = arith.constant 8 : index
    %c0_56 = arith.constant 0 : index
    %83 = vector.load %arg4[%c8, %c0_56] : memref<9x128xf32, #tpu.memory_space<vmem>>, vector<1x128xf32>
    %84 = vector.broadcast %83 : vector<1x128xf32> to vector<8x128xf32>
    %85 = arith.addf %82, %84 : vector<8x128xf32>
    %cst_57 = arith.constant 0.000000e+00 : f32
    %86 = vector.broadcast %cst_57 : f32 to vector<8x128xf32>
    %87 = arith.maximumf %85, %86 : vector<8x128xf32>
    %88 = arith.truncf %87 : vector<8x128xf32> to vector<8x128xbf16>
    %c0_58 = arith.constant 0 : index
    %c0_59 = arith.constant 0 : index
    %89 = vector.load %arg7[%c0_58, %c0_59] : memref<128x1xbf16, #tpu.memory_space<vmem>>, vector<128x1xbf16>
    %cst_60 = arith.constant dense<0.000000e+00> : vector<8x1xf32>
    %90 = tpu.matmul %88, %89, %cst_60 {dimension_numbers = #tpu.dot_dimension_numbers<[1], [0], [0], [1], [0, 0, 1, 1], [], []>} : vector<8x128xbf16>, vector<128x1xbf16>, vector<8x1xf32> -> vector<8x1xf32>
    %c0_61 = arith.constant 0 : index
    %c0_62 = arith.constant 0 : index
    %91 = vector.load %arg8[%c0_61, %c0_62] : memref<1x1xf32, #tpu.memory_space<vmem>>, vector<1x1xf32>
    %92 = vector.broadcast %91 : vector<1x1xf32> to vector<8x1xf32>
    %93 = arith.addf %90, %92 : vector<8x1xf32>
    %94 = tpu.concatenate %93, %78 in 1 : vector<8x1xf32>, vector<8x1xf32> -> vector<8x2xf32>
    %c0_63 = arith.constant 0 : index
    %c0_64 = arith.constant 0 : index
    %95 = vector.load %arg9[%c0_63, %c0_64] : memref<8x2xf32, #tpu.memory_space<vmem>>, vector<8x2xf32>
    tpu.vector_store %arg9[%c0_63, %c0_64], %94 {strides = array<i32>} : memref<8x2xf32, #tpu.memory_space<vmem>>, vector<8x2xf32>,
    return
  }
  func.func @transform_0(%arg0: i32) -> (i32, i32) {
    %c0_i32 = arith.constant 0 : i32
    %c0_i32_0 = arith.constant 0 : i32
    return %arg0, %c0_i32 : i32, i32
  }
  func.func @transform_1(%arg0: i32) -> (i32, i32) {
    %c0_i32 = arith.constant 0 : i32
    %c0_i32_0 = arith.constant 0 : i32
    %c0_i32_1 = arith.constant 0 : i32
    return %c0_i32, %c0_i32_0 : i32, i32
  }
  func.func @transform_2(%arg0: i32) -> (i32, i32, i32) {
    %c0_i32 = arith.constant 0 : i32
    %c0_i32_0 = arith.constant 0 : i32
    %c0_i32_1 = arith.constant 0 : i32
    %c0_i32_2 = arith.constant 0 : i32
    return %c0_i32, %c0_i32_0, %c0_i32_1 : i32, i32, i32
  }
  func.func @transform_3(%arg0: i32) -> (i32, i32) {
    %c0_i32 = arith.constant 0 : i32
    %c0_i32_0 = arith.constant 0 : i32
    %c0_i32_1 = arith.constant 0 : i32
    return %c0_i32, %c0_i32_0 : i32, i32
  }
  func.func @transform_4(%arg0: i32) -> (i32, i32) {
    %c0_i32 = arith.constant 0 : i32
    %c0_i32_0 = arith.constant 0 : i32
    %c0_i32_1 = arith.constant 0 : i32
    return %c0_i32, %c0_i32_0 : i32, i32
  }
  func.func @transform_5(%arg0: i32) -> (i32, i32) {
    %c0_i32 = arith.constant 0 : i32
    %c0_i32_0 = arith.constant 0 : i32
    %c0_i32_1 = arith.constant 0 : i32
    return %c0_i32, %c0_i32_0 : i32, i32
  }
  func.func @transform_6(%arg0: i32) -> (i32, i32) {
    %c0_i32 = arith.constant 0 : i32
    %c0_i32_0 = arith.constant 0 : i32
    %c0_i32_1 = arith.constant 0 : i32
    return %c0_i32, %c0_i32_0 : i32, i32
  }
  func.func @transform_7(%arg0: i32) -> (i32, i32) {
    %c0_i32 = arith.constant 0 : i32
    %c0_i32_0 = arith.constant 0 : i32
    %c0_i32_1 = arith.constant 0 : i32
    return %c0_i32, %c0_i32_0 : i32, i32
  }
  func.func @transform_8(%arg0: i32) -> (i32, i32) {
    %c0_i32 = arith.constant 0 : i32
    %c0_i32_0 = arith.constant 0 : i32
    return %arg0, %c0_i32 : i32, i32
  }
}

</mosaic_0001>

<llo_original>
// kernel: tpu_custom_call.1
$region0: #{tpu_custom_call.1}
  #allocation0 [shape = 'u32[]', space=smem, size = 0x4, offset = 0x4, fixed_abs, tag = 'smem constant byte address 0x4 - core index']
  #allocation1 [shape = 'u32[144,128]{1,0:T(1,128)}', space=vmem, size = 0x12000, scoped, tag = 'internal scratch']
  #allocation2 [shape = 'f32[1,1]{1,0:T(1,128)S(1)}', space=vmem, size = 0x200, scoped, tag = 'scoped memory for tpu_custom_call.1']
  #allocation3 [shape = 'f32[1,1]{1,0:T(1,128)S(1)}', space=vmem, size = 0x200, scoped, tag = 'scoped memory for tpu_custom_call.1']
  %s0 = inlined_call_operand.vmem [shape: f32[8,68], index: 0, kind: input, shape index: {}]
  %s1 = inlined_call_operand.vmem [shape: bf16[68,128], index: 1, kind: input, shape index: {}]
  %s2 = inlined_call_operand.hbm [shape: bf16[8,128,128], index: 2, kind: input, shape index: {}]
  %s3 = inlined_call_operand.vmem [shape: f32[9,128], index: 3, kind: input, shape index: {}]
  %s4 = inlined_call_operand.vmem [shape: bf16[128,1], index: 4, kind: input, shape index: {}]
  %s5 = inlined_call_operand.<no memory space> [shape: f32[1,1], index: 5, kind: input, shape index: {}]
  %s6 = inlined_call_operand.vmem [shape: bf16[128,1], index: 6, kind: input, shape index: {}]
  %s7 = inlined_call_operand.<no memory space> [shape: f32[1,1], index: 7, kind: input, shape index: {}]
  %s8 = inlined_call_operand.vmem [shape: f32[8,2], index: 8, kind: output, shape index: {}]
  %s9 = sld [smem:[#allocation0]]
  $region46: #{tpu_custom_call.1} parent=0
    _
  %s11 = ssub.s32 1, %s9
  %s12 = scalar_select 0, %s11, %s9
  %v13 = vstv %s5
  %14 = vst [vmem:[#allocation2] sm:$0x1] %v13
  %v15 = vstv %s7
  %16 = vst [vmem:[#allocation3] sm:$0x1] %v15
  $region1: #{tpu_custom_call.1} parent=0
    #allocation4 [shape = 'u8[262144]{0}', space=vmem, size = 0x40000, scoped, tag = 'input window, operand 2, single buffered']
    #allocation5 [shape = 's32[1]{0}', space=sflag, size = 0x4, scoped, tag = 'scoped memory for tpu_custom_call.1']
    %17 = vsyncpa [#allocation5], 0
    // Predicated region
    $region2: #{tpu_custom_call.1} parent=1 // pred_check
      _
    $region3: #{tpu_custom_call.1} parent=1 // pred_check_branch
      %19 = sbr.rel (0) target = $region5
    $region4: #{tpu_custom_call.1} parent=1 // pred_region
      _
    $region5: #{tpu_custom_call.1} parent=1 // pred_fallthru
      _
    // Predicated region
    $region6: #{tpu_custom_call.1} parent=1 // pred_check
      _
    $region7: #{tpu_custom_call.1} parent=1 // pred_check_branch
      %21 = sbr.rel (0) target = $region9
    $region8: #{tpu_custom_call.1} parent=1 // pred_region
      _
    $region9: #{tpu_custom_call.1} parent=1 // pred_fallthru
      _
    // Predicated region
    $region10: #{tpu_custom_call.1} parent=1 // pred_check
      _
    $region11: #{tpu_custom_call.1} parent=1 // pred_check_branch
      %23 = sbr.rel (0) target = $region13
    $region12: #{tpu_custom_call.1} parent=1 // pred_region
      %s25 = ssub.s32 8192, 8192
      %26 = vsyncadd [#allocation5], %s25
      %s27 = sshll.u32 [#allocation4], 4
      %s28 = int_to_ptr.vmem [resolvable:$true] %s27
      %33 = dma.hbm_to_vmem [thread:$0]  %s2, 8192, %s28, [#allocation5], 64, 64, 4
    $region13: #{tpu_custom_call.1} parent=1 // pred_fallthru
      _
    // Predicated region
    $region14: #{tpu_custom_call.1} parent=1 // pred_check
      _
    $region15: #{tpu_custom_call.1} parent=1 // pred_check_branch
      %35 = sbr.rel (0) target = $region17
    $region16: #{tpu_custom_call.1} parent=1 // pred_region
      _
    $region17: #{tpu_custom_call.1} parent=1 // pred_fallthru
      _
    // Predicated region
    $region18: #{tpu_custom_call.1} parent=1 // pred_check
      _
    $region19: #{tpu_custom_call.1} parent=1 // pred_check_branch
      %37 = sbr.rel (0) target = $region21
    $region20: #{tpu_custom_call.1} parent=1 // pred_region
      _
    $region21: #{tpu_custom_call.1} parent=1 // pred_fallthru
      _
    // Predicated region
    $region22: #{tpu_custom_call.1} parent=1 // pred_check
      _
    $region23: #{tpu_custom_call.1} parent=1 // pred_check_branch
      %39 = sbr.rel (0) target = $region25
    $region24: #{tpu_custom_call.1} parent=1 // pred_region
      _
    $region25: #{tpu_custom_call.1} parent=1 // pred_fallthru
      _
    // Predicated region
    $region26: #{tpu_custom_call.1} parent=1 // pred_check
      _
    $region27: #{tpu_custom_call.1} parent=1 // pred_check_branch
      %41 = sbr.rel (0) target = $region29
    $region28: #{tpu_custom_call.1} parent=1 // pred_region
      _
    $region29: #{tpu_custom_call.1} parent=1 // pred_fallthru
      _
    // Predicated region
    $region30: #{tpu_custom_call.1} parent=1 // pred_check
      _
    $region31: #{tpu_custom_call.1} parent=1 // pred_check_branch
      %43 = sbr.rel (0) target = $region33
    $region32: #{tpu_custom_call.1} parent=1 // pred_region
      _
    $region33: #{tpu_custom_call.1} parent=1 // pred_fallthru
      _
    // Predicated region
    $region34: #{tpu_custom_call.1} parent=1 // pred_check
      _
    $region35: #{tpu_custom_call.1} parent=1 // pred_check_branch
      %45 = sbr.rel (0) target = $region37
    $region36: #{tpu_custom_call.1} parent=1 // pred_region
      %46 = dma.done [#allocation5], 8192
    $region37: #{tpu_custom_call.1} parent=1 // pred_fallthru
      _
    %v48 = vld [vmem:[%s0] sm:$0xff]
    %v49 = vpack.c.bf16 %v48, %v48
    %v50 = vld [vmem:[%s1] sm:$0xf]
    %v51 = vld [vmem:[%s1 + $0x4] sm:$0xf]
    %v52 = vld [vmem:[%s1 + $0x8] sm:$0xf]
    %v53 = vld [vmem:[%s1 + $0xc] sm:$0xf]
    %v54 = vld [vmem:[%s1 + $0x10] sm:$0xf]
    %v55 = vld [vmem:[%s1 + $0x14] sm:$0xf]
    %v56 = vld [vmem:[%s1 + $0x18] sm:$0xf]
    %v57 = vld [vmem:[%s1 + $0x1c] sm:$0xf]
    %v58 = vld [vmem:[%s1 + $0x20] sm:$0x3]
    %v59 = vld [vmem:[%s3] sm:$0x1]
    %v60 = vlaneseq
    %v61 = vshrl.u32 %v60, 7
    %v62 = vsub.s32 0, %v61
    %v63 = vrot.slane %v59, %v62
    %v73 = vunpack.c.l.b16 %v50
    %v74 = vunpack.c.l.b16 %v51
    %v75 = vunpack.c.l.b16 %v52
    %v76 = vunpack.c.l.b16 %v53
    %v77 = vunpack.c.l.b16 %v54
    %v78 = vunpack.c.l.b16 %v55
    %v79 = vunpack.c.l.b16 %v56
    %v80 = vunpack.c.l.b16 %v57
    %v81 = vunpack.c.l.b16 %v58
    %v82 = vpack.c.b16 %v74, %v73
    %v83 = vpack.c.b16 %v76, %v75
    %v84 = vpack.c.b16 %v78, %v77
    %v85 = vpack.c.b16 %v80, %v79
    %v86 = vpack.c.b16 %v81, %v81
    %vm91 = vcmask 556032
    %v93 = vsel %vm91, %v49, 0
    %vm95 = vcmask 1041408
    %v97 = vsel %vm95, %v86, 0
    %99 = vmatprep.subr.bf16.mxu0 0
    %100 = vmatpush1.bf16.msra.mxu0 %v82
    %101 = vmatprep.subr.bf16.mxu0 0
    %102 = vmatpush1.bf16.msra.mxu0 %v83
    %103 = vmatprep.subr.bf16.mxu0 0
    %104 = vmatpush1.bf16.msra.mxu0 %v84
    %105 = vmatprep.subr.bf16.mxu0 0
    %106 = vmatpush1.bf16.msra.mxu0 %v85
    %107 = vmatprep.subr.bf16.mxu0 0
    %108 = vmatpush1.bf16.msra.mxu0 %v97
    %109 = vmatprep.subr.bf16.mxu0 0
    %110 = vmatpush1.bf16.msra.mxu0 0
    %111 = vmatprep.subr.bf16.mxu0 0
    %112 = vmatpush1.bf16.msra.mxu0 0
    %113 = vmatprep.subr.bf16.mxu0 0
    %114 = vmatpush1.bf16.msra.mxu0 0
    %115 = vmatprep.subr.bf16.mxu0 0
    %116 = vmatpush1.bf16.msra.mxu0 0
    %117 = vmatprep.subr.bf16.mxu0 0
    %118 = vmatpush1.bf16.msra.mxu0 0
    %119 = vmatprep.subr.bf16.mxu0 0
    %120 = vmatpush1.bf16.msra.mxu0 0
    %121 = vmatprep.subr.bf16.mxu0 0
    %122 = vmatpush1.bf16.msra.mxu0 0
    %123 = vmatprep.subr.bf16.mxu0 0
    %124 = vmatpush1.bf16.msra.mxu0 0
    %125 = vmatprep.subr.bf16.mxu0 0
    %126 = vmatpush1.bf16.msra.mxu0 0
    %127 = vmatprep.subr.bf16.mxu0 0
    %128 = vmatpush1.bf16.msra.mxu0 0
    %129 = vmatprep.subr.bf16.mxu0 0
    %130 = vmatpush1.bf16.msra.mxu0 0
    %131 = vmatprep.mubr.bf16.mxu0 0
    %132 = vmatmul.mubr.bf16.gmra.mrb[0].mxu0 %v93
    %v133 = vpop.f32.mrb[0].mxu0
    %v134 = vadd.f32 %v63, %v133
    %v135 = vpop.f32.mrb[0].mxu0
    %v136 = vpop.f32.mrb[0].mxu0
    %v137 = vpop.f32.mrb[0].mxu0
    %138 = vdwg.mxu0
    %v139 = vmax.f32 %v134, 0.0
    %v140 = vpack.c.bf16 %v139, %v139
    %v141 = vld [vmem:[#allocation4] sm:$0xf]
    %v142 = vld [vmem:[#allocation4 + $0x4] sm:$0xf]
    %v143 = vld [vmem:[#allocation4 + $0x8] sm:$0xf]
    %v144 = vld [vmem:[#allocation4 + $0xc] sm:$0xf]
    %v145 = vld [vmem:[#allocation4 + $0x10] sm:$0xf]
    %v146 = vld [vmem:[#allocation4 + $0x14] sm:$0xf]
    %v147 = vld [vmem:[#allocation4 + $0x18] sm:$0xf]
    %v148 = vld [vmem:[#allocation4 + $0x1c] sm:$0xf]
    %v149 = vld [vmem:[#allocation4 + $0x20] sm:$0xf]
    %v150 = vld [vmem:[#allocation4 + $0x24] sm:$0xf]
    %v151 = vld [vmem:[#allocation4 + $0x28] sm:$0xf]
    %v152 = vld [vmem:[#allocation4 + $0x2c] sm:$0xf]
    %v153 = vld [vmem:[#allocation4 + $0x30] sm:$0xf]
    %v154 = vld [vmem:[#allocation4 + $0x34] sm:$0xf]
    %v155 = vld [vmem:[#allocation4 + $0x38] sm:$0xf]
    %v156 = vld [vmem:[#allocation4 + $0x3c] sm:$0xf]
    %v157 = vld [vmem:[%s3 + $0x1] sm:$0x1]
    %v158 = vlaneseq
    %v159 = vshrl.u32 %v158, 7
    %v160 = vsub.s32 0, %v159
    %v161 = vrot.slane %v157, %v160
    %v178 = vunpack.c.l.b16 %v141
    %v179 = vunpack.c.l.b16 %v142
    %v180 = vunpack.c.l.b16 %v143
    %v181 = vunpack.c.l.b16 %v144
    %v182 = vunpack.c.l.b16 %v145
    %v183 = vunpack.c.l.b16 %v146
    %v184 = vunpack.c.l.b16 %v147
    %v185 = vunpack.c.l.b16 %v148
    %v186 = vunpack.c.l.b16 %v149
    %v187 = vunpack.c.l.b16 %v150
    %v188 = vunpack.c.l.b16 %v151
    %v189 = vunpack.c.l.b16 %v152
    %v190 = vunpack.c.l.b16 %v153
    %v191 = vunpack.c.l.b16 %v154
    %v192 = vunpack.c.l.b16 %v155
    %v193 = vunpack.c.l.b16 %v156
    %v194 = vpack.c.b16 %v179, %v178
    %v195 = vpack.c.b16 %v181, %v180
    %v196 = vpack.c.b16 %v183, %v182
    %v197 = vpack.c.b16 %v185, %v184
    %v198 = vpack.c.b16 %v187, %v186
    %v199 = vpack.c.b16 %v189, %v188
    %v200 = vpack.c.b16 %v191, %v190
    %v201 = vpack.c.b16 %v193, %v192
    %210 = vmatprep.subr.bf16.mxu0 0
    %211 = vmatpush1.bf16.msra.mxu0 %v194
    %212 = vmatprep.subr.bf16.mxu0 0
    %213 = vmatpush1.bf16.msra.mxu0 %v195
    %214 = vmatprep.subr.bf16.mxu0 0
    %215 = vmatpush1.bf16.msra.mxu0 %v196
    %216 = vmatprep.subr.bf16.mxu0 0
    %217 = vmatpush1.bf16.msra.mxu0 %v197
    %218 = vmatprep.subr.bf16.mxu0 0
    %219 = vmatpush1.bf16.msra.mxu0 %v198
    %220 = vmatprep.subr.bf16.mxu0 0
    %221 = vmatpush1.bf16.msra.mxu0 %v199
    %222 = vmatprep.subr.bf16.mxu0 0
    %223 = vmatpush1.bf16.msra.mxu0 %v200
    %224 = vmatprep.subr.bf16.mxu0 0
    %225 = vmatpush1.bf16.msra.mxu0 %v201
    %226 = vmatprep.subr.bf16.mxu0 0
    %227 = vmatpush1.bf16.msra.mxu0 0
    %228 = vmatprep.subr.bf16.mxu0 0
    %229 = vmatpush1.bf16.msra.mxu0 0
    %230 = vmatprep.subr.bf16.mxu0 0
    %231 = vmatpush1.bf16.msra.mxu0 0
    %232 = vmatprep.subr.bf16.mxu0 0
    %233 = vmatpush1.bf16.msra.mxu0 0
    %234 = vmatprep.subr.bf16.mxu0 0
    %235 = vmatpush1.bf16.msra.mxu0 0
    %236 = vmatprep.subr.bf16.mxu0 0
    %237 = vmatpush1.bf16.msra.mxu0 0
    %238 = vmatprep.subr.bf16.mxu0 0
    %239 = vmatpush1.bf16.msra.mxu0 0
    %240 = vmatprep.subr.bf16.mxu0 0
    %241 = vmatpush1.bf16.msra.mxu0 0
    %242 = vmatprep.mubr.bf16.mxu0 0
    %243 = vmatmul.mubr.bf16.gmra.mrb[0].mxu0 %v140
    %v244 = vpop.f32.mrb[0].mxu0
    %v245 = vadd.f32 %v161, %v244
    %v246 = vpop.f32.mrb[0].mxu0
    %v247 = vpop.f32.mrb[0].mxu0
    %v248 = vpop.f32.mrb[0].mxu0
    %249 = vdwg.mxu0
    %v250 = vmax.f32 %v245, 0.0
    %v251 = vpack.c.bf16 %v250, %v250
    %s252 = scalar_lea.vmem [#allocation4], 64
    %v253 = vld [vmem:[%s252] sm:$0xf]
    %v254 = vld [vmem:[%s252 + $0x4] sm:$0xf]
    %v255 = vld [vmem:[%s252 + $0x8] sm:$0xf]
    %v256 = vld [vmem:[%s252 + $0xc] sm:$0xf]
    %v257 = vld [vmem:[%s252 + $0x10] sm:$0xf]
    %v258 = vld [vmem:[%s252 + $0x14] sm:$0xf]
    %v259 = vld [vmem:[%s252 + $0x18] sm:$0xf]
    %v260 = vld [vmem:[%s252 + $0x1c] sm:$0xf]
    %v261 = vld [vmem:[%s252 + $0x20] sm:$0xf]
    %v262 = vld [vmem:[%s252 + $0x24] sm:$0xf]
    %v263 = vld [vmem:[%s252 + $0x28] sm:$0xf]
    %v264 = vld [vmem:[%s252 + $0x2c] sm:$0xf]
    %v265 = vld [vmem:[%s252 + $0x30] sm:$0xf]
    %v266 = vld [vmem:[%s252 + $0x34] sm:$0xf]
    %v267 = vld [vmem:[%s252 + $0x38] sm:$0xf]
    %v268 = vld [vmem:[%s252 + $0x3c] sm:$0xf]
    %v269 = vld [vmem:[%s3 + $0x2] sm:$0x1]
    %v270 = vlaneseq
    %v271 = vshrl.u32 %v270, 7
    %v272 = vsub.s32 0, %v271
    %v273 = vrot.slane %v269, %v272
    %v290 = vunpack.c.l.b16 %v253
    %v291 = vunpack.c.l.b16 %v254
    %v292 = vunpack.c.l.b16 %v255
    %v293 = vunpack.c.l.b16 %v256
    %v294 = vunpack.c.l.b16 %v257
    %v295 = vunpack.c.l.b16 %v258
    %v296 = vunpack.c.l.b16 %v259
    %v297 = vunpack.c.l.b16 %v260
    %v298 = vunpack.c.l.b16 %v261
    %v299 = vunpack.c.l.b16 %v262
    %v300 = vunpack.c.l.b16 %v263
    %v301 = vunpack.c.l.b16 %v264
    %v302 = vunpack.c.l.b16 %v265
    %v303 = vunpack.c.l.b16 %v266
    %v304 = vunpack.c.l.b16 %v267
    %v305 = vunpack.c.l.b16 %v268
    %v306 = vpack.c.b16 %v291, %v290
    %v307 = vpack.c.b16 %v293, %v292
    %v308 = vpack.c.b16 %v295, %v294
    %v309 = vpack.c.b16 %v297, %v296
    %v310 = vpack.c.b16 %v299, %v298
    %v311 = vpack.c.b16 %v301, %v300
    %v312 = vpack.c.b16 %v303, %v302
    %v313 = vpack.c.b16 %v305, %v304
    %322 = vmatprep.subr.bf16.mxu0 0
    %323 = vmatpush1.bf16.msra.mxu0 %v306
    %324 = vmatprep.subr.bf16.mxu0 0
    %325 = vmatpush1.bf16.msra.mxu0 %v307
    %326 = vmatprep.subr.bf16.mxu0 0
    %327 = vmatpush1.bf16.msra.mxu0 %v308
    %328 = vmatprep.subr.bf16.mxu0 0
    %329 = vmatpush1.bf16.msra.mxu0 %v309
    %330 = vmatprep.subr.bf16.mxu0 0
    %331 = vmatpush1.bf16.msra.mxu0 %v310
    %332 = vmatprep.subr.bf16.mxu0 0
    %333 = vmatpush1.bf16.msra.mxu0 %v311
    %334 = vmatprep.subr.bf16.mxu0 0
    %335 = vmatpush1.bf16.msra.mxu0 %v312
    %336 = vmatprep.subr.bf16.mxu0 0
    %337 = vmatpush1.bf16.msra.mxu0 %v313
    %338 = vmatprep.subr.bf16.mxu0 0
    %339 = vmatpush1.bf16.msra.mxu0 0
    %340 = vmatprep.subr.bf16.mxu0 0
    %341 = vmatpush1.bf16.msra.mxu0 0
    %342 = vmatprep.subr.bf16.mxu0 0
    %343 = vmatpush1.bf16.msra.mxu0 0
    %344 = vmatprep.subr.bf16.mxu0 0
    %345 = vmatpush1.bf16.msra.mxu0 0
    %346 = vmatprep.subr.bf16.mxu0 0
    %347 = vmatpush1.bf16.msra.mxu0 0
    %348 = vmatprep.subr.bf16.mxu0 0
    %349 = vmatpush1.bf16.msra.mxu0 0
    %350 = vmatprep.subr.bf16.mxu0 0
    %351 = vmatpush1.bf16.msra.mxu0 0
    %352 = vmatprep.subr.bf16.mxu0 0
    %353 = vmatpush1.bf16.msra.mxu0 0
    %354 = vmatprep.mubr.bf16.mxu0 0
    %355 = vmatmul.mubr.bf16.gmra.mrb[0].mxu0 %v251
    %v356 = vpop.f32.mrb[0].mxu0
    %v357 = vadd.f32 %v273, %v356
    %v358 = vpop.f32.mrb[0].mxu0
    %v359 = vpop.f32.mrb[0].mxu0
    %v360 = vpop.f32.mrb[0].mxu0
    %361 = vdwg.mxu0
    %v362 = vmax.f32 %v357, 0.0
    %v363 = vadd.f32 %v139, %v362
    %v364 = vpack.c.bf16 %v363, %v363
    %s365 = scalar_lea.vmem [#allocation4], 128
    %v366 = vld [vmem:[%s365] sm:$0xf]
    %v367 = vld [vmem:[%s365 + $0x4] sm:$0xf]
    %v368 = vld [vmem:[%s365 + $0x8] sm:$0xf]
    %v369 = vld [vmem:[%s365 + $0xc] sm:$0xf]
    %v370 = vld [vmem:[%s365 + $0x10] sm:$0xf]
    %v371 = vld [vmem:[%s365 + $0x14] sm:$0xf]
    %v372 = vld [vmem:[%s365 + $0x18] sm:$0xf]
    %v373 = vld [vmem:[%s365 + $0x1c] sm:$0xf]
    %v374 = vld [vmem:[%s365 + $0x20] sm:$0xf]
    %v375 = vld [vmem:[%s365 + $0x24] sm:$0xf]
    %v376 = vld [vmem:[%s365 + $0x28] sm:$0xf]
    %v377 = vld [vmem:[%s365 + $0x2c] sm:$0xf]
    %v378 = vld [vmem:[%s365 + $0x30] sm:$0xf]
    %v379 = vld [vmem:[%s365 + $0x34] sm:$0xf]
    %v380 = vld [vmem:[%s365 + $0x38] sm:$0xf]
    %v381 = vld [vmem:[%s365 + $0x3c] sm:$0xf]
    %v382 = vld [vmem:[%s3 + $0x3] sm:$0x1]
    %v383 = vlaneseq
    %v384 = vshrl.u32 %v383, 7
    %v385 = vsub.s32 0, %v384
    %v386 = vrot.slane %v382, %v385
    %v403 = vunpack.c.l.b16 %v366
    %v404 = vunpack.c.l.b16 %v367
    %v405 = vunpack.c.l.b16 %v368
    %v406 = vunpack.c.l.b16 %v369
    %v407 = vunpack.c.l.b16 %v370
    %v408 = vunpack.c.l.b16 %v371
    %v409 = vunpack.c.l.b16 %v372
    %v410 = vunpack.c.l.b16 %v373
    %v411 = vunpack.c.l.b16 %v374
    %v412 = vunpack.c.l.b16 %v375
    %v413 = vunpack.c.l.b16 %v376
    %v414 = vunpack.c.l.b16 %v377
    %v415 = vunpack.c.l.b16 %v378
    %v416 = vunpack.c.l.b16 %v379
    %v417 = vunpack.c.l.b16 %v380
    %v418 = vunpack.c.l.b16 %v381
    %v419 = vpack.c.b16 %v404, %v403
    %v420 = vpack.c.b16 %v406, %v405
    %v421 = vpack.c.b16 %v408, %v407
    %v422 = vpack.c.b16 %v410, %v409
    %v423 = vpack.c.b16 %v412, %v411
    %v424 = vpack.c.b16 %v414, %v413
    %v425 = vpack.c.b16 %v416, %v415
    %v426 = vpack.c.b16 %v418, %v417
    %435 = vmatprep.subr.bf16.mxu0 0
    %436 = vmatpush1.bf16.msra.mxu0 %v419
    %437 = vmatprep.subr.bf16.mxu0 0
    %438 = vmatpush1.bf16.msra.mxu0 %v420
    %439 = vmatprep.subr.bf16.mxu0 0
    %440 = vmatpush1.bf16.msra.mxu0 %v421
    %441 = vmatprep.subr.bf16.mxu0 0
    %442 = vmatpush1.bf16.msra.mxu0 %v422
    %443 = vmatprep.subr.bf16.mxu0 0
    %444 = vmatpush1.bf16.msra.mxu0 %v423
    %445 = vmatprep.subr.bf16.mxu0 0
    %446 = vmatpush1.bf16.msra.mxu0 %v424
    %447 = vmatprep.subr.bf16.mxu0 0
    %448 = vmatpush1.bf16.msra.mxu0 %v425
    %449 = vmatprep.subr.bf16.mxu0 0
    %450 = vmatpush1.bf16.msra.mxu0 %v426
    %451 = vmatprep.subr.bf16.mxu0 0
    %452 = vmatpush1.bf16.msra.mxu0 0
    %453 = vmatprep.subr.bf16.mxu0 0
    %454 = vmatpush1.bf16.msra.mxu0 0
    %455 = vmatprep.subr.bf16.mxu0 0
    %456 = vmatpush1.bf16.msra.mxu0 0
    %457 = vmatprep.subr.bf16.mxu0 0
    %458 = vmatpush1.bf16.msra.mxu0 0
    %459 = vmatprep.subr.bf16.mxu0 0
    %460 = vmatpush1.bf16.msra.mxu0 0
    %461 = vmatprep.subr.bf16.mxu0 0
    %462 = vmatpush1.bf16.msra.mxu0 0
    %463 = vmatprep.subr.bf16.mxu0 0
    %464 = vmatpush1.bf16.msra.mxu0 0
    %465 = vmatprep.subr.bf16.mxu0 0
    %466 = vmatpush1.bf16.msra.mxu0 0
    %467 = vmatprep.mubr.bf16.mxu0 0
    %468 = vmatmul.mubr.bf16.gmra.mrb[0].mxu0 %v364
    %v469 = vpop.f32.mrb[0].mxu0
    %v470 = vadd.f32 %v386, %v469
    %v471 = vpop.f32.mrb[0].mxu0
    %v472 = vpop.f32.mrb[0].mxu0
    %v473 = vpop.f32.mrb[0].mxu0
    %474 = vdwg.mxu0
    %v475 = vmax.f32 %v470, 0.0
    %v476 = vpack.c.bf16 %v475, %v475
    %s477 = scalar_lea.vmem [#allocation4], 192
    %v478 = vld [vmem:[%s477] sm:$0xf]
    %v479 = vld [vmem:[%s477 + $0x4] sm:$0xf]
    %v480 = vld [vmem:[%s477 + $0x8] sm:$0xf]
    %v481 = vld [vmem:[%s477 + $0xc] sm:$0xf]
    %v482 = vld [vmem:[%s477 + $0x10] sm:$0xf]
    %v483 = vld [vmem:[%s477 + $0x14] sm:$0xf]
    %v484 = vld [vmem:[%s477 + $0x18] sm:$0xf]
    %v485 = vld [vmem:[%s477 + $0x1c] sm:$0xf]
    %v486 = vld [vmem:[%s477 + $0x20] sm:$0xf]
    %v487 = vld [vmem:[%s477 + $0x24] sm:$0xf]
    %v488 = vld [vmem:[%s477 + $0x28] sm:$0xf]
    %v489 = vld [vmem:[%s477 + $0x2c] sm:$0xf]
    %v490 = vld [vmem:[%s477 + $0x30] sm:$0xf]
    %v491 = vld [vmem:[%s477 + $0x34] sm:$0xf]
    %v492 = vld [vmem:[%s477 + $0x38] sm:$0xf]
    %v493 = vld [vmem:[%s477 + $0x3c] sm:$0xf]
    %v494 = vld [vmem:[%s3 + $0x4] sm:$0x1]
    %v495 = vlaneseq
    %v496 = vshrl.u32 %v495, 7
    %v497 = vsub.s32 0, %v496
    %v498 = vrot.slane %v494, %v497
    %v515 = vunpack.c.l.b16 %v478
    %v516 = vunpack.c.l.b16 %v479
    %v517 = vunpack.c.l.b16 %v480
    %v518 = vunpack.c.l.b16 %v481
    %v519 = vunpack.c.l.b16 %v482
    %v520 = vunpack.c.l.b16 %v483
    %v521 = vunpack.c.l.b16 %v484
    %v522 = vunpack.c.l.b16 %v485
    %v523 = vunpack.c.l.b16 %v486
    %v524 = vunpack.c.l.b16 %v487
    %v525 = vunpack.c.l.b16 %v488
    %v526 = vunpack.c.l.b16 %v489
    %v527 = vunpack.c.l.b16 %v490
    %v528 = vunpack.c.l.b16 %v491
    %v529 = vunpack.c.l.b16 %v492
    %v530 = vunpack.c.l.b16 %v493
    %v531 = vpack.c.b16 %v516, %v515
    %v532 = vpack.c.b16 %v518, %v517
    %v533 = vpack.c.b16 %v520, %v519
    %v534 = vpack.c.b16 %v522, %v521
    %v535 = vpack.c.b16 %v524, %v523
    %v536 = vpack.c.b16 %v526, %v525
    %v537 = vpack.c.b16 %v528, %v527
    %v538 = vpack.c.b16 %v530, %v529
    %547 = vmatprep.subr.bf16.mxu0 0
    %548 = vmatpush1.bf16.msra.mxu0 %v531
    %549 = vmatprep.subr.bf16.mxu0 0
    %550 = vmatpush1.bf16.msra.mxu0 %v532
    %551 = vmatprep.subr.bf16.mxu0 0
    %552 = vmatpush1.bf16.msra.mxu0 %v533
    %553 = vmatprep.subr.bf16.mxu0 0
    %554 = vmatpush1.bf16.msra.mxu0 %v534
    %555 = vmatprep.subr.bf16.mxu0 0
    %556 = vmatpush1.bf16.msra.mxu0 %v535
    %557 = vmatprep.subr.bf16.mxu0 0
    %558 = vmatpush1.bf16.msra.mxu0 %v536
    %559 = vmatprep.subr.bf16.mxu0 0
    %560 = vmatpush1.bf16.msra.mxu0 %v537
    %561 = vmatprep.subr.bf16.mxu0 0
    %562 = vmatpush1.bf16.msra.mxu0 %v538
    %563 = vmatprep.subr.bf16.mxu0 0
    %564 = vmatpush1.bf16.msra.mxu0 0
    %565 = vmatprep.subr.bf16.mxu0 0
    %566 = vmatpush1.bf16.msra.mxu0 0
    %567 = vmatprep.subr.bf16.mxu0 0
    %568 = vmatpush1.bf16.msra.mxu0 0
    %569 = vmatprep.subr.bf16.mxu0 0
    %570 = vmatpush1.bf16.msra.mxu0 0
    %571 = vmatprep.subr.bf16.mxu0 0
    %572 = vmatpush1.bf16.msra.mxu0 0
    %573 = vmatprep.subr.bf16.mxu0 0
    %574 = vmatpush1.bf16.msra.mxu0 0
    %575 = vmatprep.subr.bf16.mxu0 0
    %576 = vmatpush1.bf16.msra.mxu0 0
    %577 = vmatprep.subr.bf16.mxu0 0
    %578 = vmatpush1.bf16.msra.mxu0 0
    %579 = vmatprep.mubr.bf16.mxu0 0
    %580 = vmatmul.mubr.bf16.gmra.mrb[0].mxu0 %v476
    %v581 = vpop.f32.mrb[0].mxu0
    %v582 = vadd.f32 %v498, %v581
    %v583 = vpop.f32.mrb[0].mxu0
    %v584 = vpop.f32.mrb[0].mxu0
    %v585 = vpop.f32.mrb[0].mxu0
    %586 = vdwg.mxu0
    %v587 = vmax.f32 %v582, 0.0
    %v588 = vadd.f32 %v363, %v587
    %v589 = vpack.c.bf16 %v588, %v588
    %s590 = scalar_lea.vmem [#allocation4], 256
    %v591 = vld [vmem:[%s590] sm:$0xf]
    %v592 = vld [vmem:[%s590 + $0x4] sm:$0xf]
    %v593 = vld [vmem:[%s590 + $0x8] sm:$0xf]
    %v594 = vld [vmem:[%s590 + $0xc] sm:$0xf]
    %v595 = vld [vmem:[%s590 + $0x10] sm:$0xf]
    %v596 = vld [vmem:[%s590 + $0x14] sm:$0xf]
    %v597 = vld [vmem:[%s590 + $0x18] sm:$0xf]
    %v598 = vld [vmem:[%s590 + $0x1c] sm:$0xf]
    %v599 = vld [vmem:[%s590 + $0x20] sm:$0xf]
    %v600 = vld [vmem:[%s590 + $0x24] sm:$0xf]
    %v601 = vld [vmem:[%s590 + $0x28] sm:$0xf]
    %v602 = vld [vmem:[%s590 + $0x2c] sm:$0xf]
    %v603 = vld [vmem:[%s590 + $0x30] sm:$0xf]
    %v604 = vld [vmem:[%s590 + $0x34] sm:$0xf]
    %v605 = vld [vmem:[%s590 + $0x38] sm:$0xf]
    %v606 = vld [vmem:[%s590 + $0x3c] sm:$0xf]
    %v607 = vld [vmem:[%s3 + $0x5] sm:$0x1]
    %v608 = vlaneseq
    %v609 = vshrl.u32 %v608, 7
    %v610 = vsub.s32 0, %v609
    %v611 = vrot.slane %v607, %v610
    %v628 = vunpack.c.l.b16 %v591
    %v629 = vunpack.c.l.b16 %v592
    %v630 = vunpack.c.l.b16 %v593
    %v631 = vunpack.c.l.b16 %v594
    %v632 = vunpack.c.l.b16 %v595
    %v633 = vunpack.c.l.b16 %v596
    %v634 = vunpack.c.l.b16 %v597
    %v635 = vunpack.c.l.b16 %v598
    %v636 = vunpack.c.l.b16 %v599
    %v637 = vunpack.c.l.b16 %v600
    %v638 = vunpack.c.l.b16 %v601
    %v639 = vunpack.c.l.b16 %v602
    %v640 = vunpack.c.l.b16 %v603
    %v641 = vunpack.c.l.b16 %v604
    %v642 = vunpack.c.l.b16 %v605
    %v643 = vunpack.c.l.b16 %v606
    %v644 = vpack.c.b16 %v629, %v628
    %v645 = vpack.c.b16 %v631, %v630
    %v646 = vpack.c.b16 %v633, %v632
    %v647 = vpack.c.b16 %v635, %v634
    %v648 = vpack.c.b16 %v637, %v636
    %v649 = vpack.c.b16 %v639, %v638
    %v650 = vpack.c.b16 %v641, %v640
    %v651 = vpack.c.b16 %v643, %v642
    %660 = vmatprep.subr.bf16.mxu0 0
    %661 = vmatpush1.bf16.msra.mxu0 %v644
    %662 = vmatprep.subr.bf16.mxu0 0
    %663 = vmatpush1.bf16.msra.mxu0 %v645
    %664 = vmatprep.subr.bf16.mxu0 0
    %665 = vmatpush1.bf16.msra.mxu0 %v646
    %666 = vmatprep.subr.bf16.mxu0 0
    %667 = vmatpush1.bf16.msra.mxu0 %v647
    %668 = vmatprep.subr.bf16.mxu0 0
    %669 = vmatpush1.bf16.msra.mxu0 %v648
    %670 = vmatprep.subr.bf16.mxu0 0
    %671 = vmatpush1.bf16.msra.mxu0 %v649
    %672 = vmatprep.subr.bf16.mxu0 0
    %673 = vmatpush1.bf16.msra.mxu0 %v650
    %674 = vmatprep.subr.bf16.mxu0 0
    %675 = vmatpush1.bf16.msra.mxu0 %v651
    %676 = vmatprep.subr.bf16.mxu0 0
    %677 = vmatpush1.bf16.msra.mxu0 0
    %678 = vmatprep.subr.bf16.mxu0 0
    %679 = vmatpush1.bf16.msra.mxu0 0
    %680 = vmatprep.subr.bf16.mxu0 0
    %681 = vmatpush1.bf16.msra.mxu0 0
    %682 = vmatprep.subr.bf16.mxu0 0
    %683 = vmatpush1.bf16.msra.mxu0 0
    %684 = vmatprep.subr.bf16.mxu0 0
    %685 = vmatpush1.bf16.msra.mxu0 0
    %686 = vmatprep.subr.bf16.mxu0 0
    %687 = vmatpush1.bf16.msra.mxu0 0
    %688 = vmatprep.subr.bf16.mxu0 0
    %689 = vmatpush1.bf16.msra.mxu0 0
    %690 = vmatprep.subr.bf16.mxu0 0
    %691 = vmatpush1.bf16.msra.mxu0 0
    %692 = vmatprep.mubr.bf16.mxu0 0
    %693 = vmatmul.mubr.bf16.gmra.mrb[0].mxu0 %v589
    %v694 = vpop.f32.mrb[0].mxu0
    %v695 = vadd.f32 %v611, %v694
    %v696 = vpop.f32.mrb[0].mxu0
    %v697 = vpop.f32.mrb[0].mxu0
    %v698 = vpop.f32.mrb[0].mxu0
    %699 = vdwg.mxu0
    %v700 = vmax.f32 %v695, 0.0
    %v701 = vpack.c.bf16 %v700, %v700
    %s702 = scalar_lea.vmem [#allocation4], 320
    %v703 = vld [vmem:[%s702] sm:$0xf]
    %v704 = vld [vmem:[%s702 + $0x4] sm:$0xf]
    %v705 = vld [vmem:[%s702 + $0x8] sm:$0xf]
    %v706 = vld [vmem:[%s702 + $0xc] sm:$0xf]
    %v707 = vld [vmem:[%s702 + $0x10] sm:$0xf]
    %v708 = vld [vmem:[%s702 + $0x14] sm:$0xf]
    %v709 = vld [vmem:[%s702 + $0x18] sm:$0xf]
    %v710 = vld [vmem:[%s702 + $0x1c] sm:$0xf]
    %v711 = vld [vmem:[%s702 + $0x20] sm:$0xf]
    %v712 = vld [vmem:[%s702 + $0x24] sm:$0xf]
    %v713 = vld [vmem:[%s702 + $0x28] sm:$0xf]
    %v714 = vld [vmem:[%s702 + $0x2c] sm:$0xf]
    %v715 = vld [vmem:[%s702 + $0x30] sm:$0xf]
    %v716 = vld [vmem:[%s702 + $0x34] sm:$0xf]
    %v717 = vld [vmem:[%s702 + $0x38] sm:$0xf]
    %v718 = vld [vmem:[%s702 + $0x3c] sm:$0xf]
    %v719 = vld [vmem:[%s3 + $0x6] sm:$0x1]
    %v720 = vlaneseq
    %v721 = vshrl.u32 %v720, 7
    %v722 = vsub.s32 0, %v721
    %v723 = vrot.slane %v719, %v722
    %v740 = vunpack.c.l.b16 %v703
    %v741 = vunpack.c.l.b16 %v704
    %v742 = vunpack.c.l.b16 %v705
    %v743 = vunpack.c.l.b16 %v706
    %v744 = vunpack.c.l.b16 %v707
    %v745 = vunpack.c.l.b16 %v708
    %v746 = vunpack.c.l.b16 %v709
    %v747 = vunpack.c.l.b16 %v710
    %v748 = vunpack.c.l.b16 %v711
    %v749 = vunpack.c.l.b16 %v712
    %v750 = vunpack.c.l.b16 %v713
    %v751 = vunpack.c.l.b16 %v714
    %v752 = vunpack.c.l.b16 %v715
    %v753 = vunpack.c.l.b16 %v716
    %v754 = vunpack.c.l.b16 %v717
    %v755 = vunpack.c.l.b16 %v718
    %v756 = vpack.c.b16 %v741, %v740
    %v757 = vpack.c.b16 %v743, %v742
    %v758 = vpack.c.b16 %v745, %v744
    %v759 = vpack.c.b16 %v747, %v746
    %v760 = vpack.c.b16 %v749, %v748
    %v761 = vpack.c.b16 %v751, %v750
    %v762 = vpack.c.b16 %v753, %v752
    %v763 = vpack.c.b16 %v755, %v754
    %772 = vmatprep.subr.bf16.mxu0 0
    %773 = vmatpush1.bf16.msra.mxu0 %v756
    %774 = vmatprep.subr.bf16.mxu0 0
    %775 = vmatpush1.bf16.msra.mxu0 %v757
    %776 = vmatprep.subr.bf16.mxu0 0
    %777 = vmatpush1.bf16.msra.mxu0 %v758
    %778 = vmatprep.subr.bf16.mxu0 0
    %779 = vmatpush1.bf16.msra.mxu0 %v759
    %780 = vmatprep.subr.bf16.mxu0 0
    %781 = vmatpush1.bf16.msra.mxu0 %v760
    %782 = vmatprep.subr.bf16.mxu0 0
    %783 = vmatpush1.bf16.msra.mxu0 %v761
    %784 = vmatprep.subr.bf16.mxu0 0
    %785 = vmatpush1.bf16.msra.mxu0 %v762
    %786 = vmatprep.subr.bf16.mxu0 0
    %787 = vmatpush1.bf16.msra.mxu0 %v763
    %788 = vmatprep.subr.bf16.mxu0 0
    %789 = vmatpush1.bf16.msra.mxu0 0
    %790 = vmatprep.subr.bf16.mxu0 0
    %791 = vmatpush1.bf16.msra.mxu0 0
    %792 = vmatprep.subr.bf16.mxu0 0
    %793 = vmatpush1.bf16.msra.mxu0 0
    %794 = vmatprep.subr.bf16.mxu0 0
    %795 = vmatpush1.bf16.msra.mxu0 0
    %796 = vmatprep.subr.bf16.mxu0 0
    %797 = vmatpush1.bf16.msra.mxu0 0
    %798 = vmatprep.subr.bf16.mxu0 0
    %799 = vmatpush1.bf16.msra.mxu0 0
    %800 = vmatprep.subr.bf16.mxu0 0
    %801 = vmatpush1.bf16.msra.mxu0 0
    %802 = vmatprep.subr.bf16.mxu0 0
    %803 = vmatpush1.bf16.msra.mxu0 0
    %804 = vmatprep.mubr.bf16.mxu0 0
    %805 = vmatmul.mubr.bf16.gmra.mrb[0].mxu0 %v701
    %v806 = vpop.f32.mrb[0].mxu0
    %v807 = vadd.f32 %v723, %v806
    %v808 = vpop.f32.mrb[0].mxu0
    %v809 = vpop.f32.mrb[0].mxu0
    %v810 = vpop.f32.mrb[0].mxu0
    %811 = vdwg.mxu0
    %v812 = vmax.f32 %v807, 0.0
    %v813 = vadd.f32 %v588, %v812
    %v814 = vpack.c.bf16 %v813, %v813
    %s815 = scalar_lea.vmem [#allocation4], 384
    %v816 = vld [vmem:[%s815] sm:$0xf]
    %v817 = vld [vmem:[%s815 + $0x4] sm:$0xf]
    %v818 = vld [vmem:[%s815 + $0x8] sm:$0xf]
    %v819 = vld [vmem:[%s815 + $0xc] sm:$0xf]
    %v820 = vld [vmem:[%s815 + $0x10] sm:$0xf]
    %v821 = vld [vmem:[%s815 + $0x14] sm:$0xf]
    %v822 = vld [vmem:[%s815 + $0x18] sm:$0xf]
    %v823 = vld [vmem:[%s815 + $0x1c] sm:$0xf]
    %v824 = vld [vmem:[%s815 + $0x20] sm:$0xf]
    %v825 = vld [vmem:[%s815 + $0x24] sm:$0xf]
    %v826 = vld [vmem:[%s815 + $0x28] sm:$0xf]
    %v827 = vld [vmem:[%s815 + $0x2c] sm:$0xf]
    %v828 = vld [vmem:[%s815 + $0x30] sm:$0xf]
    %v829 = vld [vmem:[%s815 + $0x34] sm:$0xf]
    %v830 = vld [vmem:[%s815 + $0x38] sm:$0xf]
    %v831 = vld [vmem:[%s815 + $0x3c] sm:$0xf]
    %v832 = vld [vmem:[%s3 + $0x7] sm:$0x1]
    %v833 = vlaneseq
    %v834 = vshrl.u32 %v833, 7
    %v835 = vsub.s32 0, %v834
    %v836 = vrot.slane %v832, %v835
    %v853 = vunpack.c.l.b16 %v816
    %v854 = vunpack.c.l.b16 %v817
    %v855 = vunpack.c.l.b16 %v818
    %v856 = vunpack.c.l.b16 %v819
    %v857 = vunpack.c.l.b16 %v820
    %v858 = vunpack.c.l.b16 %v821
    %v859 = vunpack.c.l.b16 %v822
    %v860 = vunpack.c.l.b16 %v823
    %v861 = vunpack.c.l.b16 %v824
    %v862 = vunpack.c.l.b16 %v825
    %v863 = vunpack.c.l.b16 %v826
    %v864 = vunpack.c.l.b16 %v827
    %v865 = vunpack.c.l.b16 %v828
    %v866 = vunpack.c.l.b16 %v829
    %v867 = vunpack.c.l.b16 %v830
    %v868 = vunpack.c.l.b16 %v831
    %v869 = vpack.c.b16 %v854, %v853
    %v870 = vpack.c.b16 %v856, %v855
    %v871 = vpack.c.b16 %v858, %v857
    %v872 = vpack.c.b16 %v860, %v859
    %v873 = vpack.c.b16 %v862, %v861
    %v874 = vpack.c.b16 %v864, %v863
    %v875 = vpack.c.b16 %v866, %v865
    %v876 = vpack.c.b16 %v868, %v867
    %885 = vmatprep.subr.bf16.mxu0 0
    %886 = vmatpush1.bf16.msra.mxu0 %v869
    %887 = vmatprep.subr.bf16.mxu0 0
    %888 = vmatpush1.bf16.msra.mxu0 %v870
    %889 = vmatprep.subr.bf16.mxu0 0
    %890 = vmatpush1.bf16.msra.mxu0 %v871
    %891 = vmatprep.subr.bf16.mxu0 0
    %892 = vmatpush1.bf16.msra.mxu0 %v872
    %893 = vmatprep.subr.bf16.mxu0 0
    %894 = vmatpush1.bf16.msra.mxu0 %v873
    %895 = vmatprep.subr.bf16.mxu0 0
    %896 = vmatpush1.bf16.msra.mxu0 %v874
    %897 = vmatprep.subr.bf16.mxu0 0
    %898 = vmatpush1.bf16.msra.mxu0 %v875
    %899 = vmatprep.subr.bf16.mxu0 0
    %900 = vmatpush1.bf16.msra.mxu0 %v876
    %901 = vmatprep.subr.bf16.mxu0 0
    %902 = vmatpush1.bf16.msra.mxu0 0
    %903 = vmatprep.subr.bf16.mxu0 0
    %904 = vmatpush1.bf16.msra.mxu0 0
    %905 = vmatprep.subr.bf16.mxu0 0
    %906 = vmatpush1.bf16.msra.mxu0 0
    %907 = vmatprep.subr.bf16.mxu0 0
    %908 = vmatpush1.bf16.msra.mxu0 0
    %909 = vmatprep.subr.bf16.mxu0 0
    %910 = vmatpush1.bf16.msra.mxu0 0
    %911 = vmatprep.subr.bf16.mxu0 0
    %912 = vmatpush1.bf16.msra.mxu0 0
    %913 = vmatprep.subr.bf16.mxu0 0
    %914 = vmatpush1.bf16.msra.mxu0 0
    %915 = vmatprep.subr.bf16.mxu0 0
    %916 = vmatpush1.bf16.msra.mxu0 0
    %917 = vmatprep.mubr.bf16.mxu0 0
    %918 = vmatmul.mubr.bf16.gmra.mrb[0].mxu0 %v814
    %v919 = vpop.f32.mrb[0].mxu0
    %v920 = vadd.f32 %v836, %v919
    %v921 = vpop.f32.mrb[0].mxu0
    %v922 = vpop.f32.mrb[0].mxu0
    %v923 = vpop.f32.mrb[0].mxu0
    %924 = vdwg.mxu0
    %v925 = vpack.c.bf16 %v920, %v920
    %v926 = vld [vmem:[%s4] sm:$0xf]
    %v927 = vld [vmem:[%s4 + $0x4] sm:$0xf]
    %v928 = vld [vmem:[%s4 + $0x8] sm:$0xf]
    %v929 = vld [vmem:[%s4 + $0xc] sm:$0xf]
    %v930 = vld [vmem:[%s4 + $0x10] sm:$0xf]
    %v931 = vld [vmem:[%s4 + $0x14] sm:$0xf]
    %v932 = vld [vmem:[%s4 + $0x18] sm:$0xf]
    %v933 = vld [vmem:[%s4 + $0x1c] sm:$0xf]
    %v934 = vld [vmem:[%s4 + $0x20] sm:$0xf]
    %v935 = vld [vmem:[%s4 + $0x24] sm:$0xf]
    %v936 = vld [vmem:[%s4 + $0x28] sm:$0xf]
    %v937 = vld [vmem:[%s4 + $0x2c] sm:$0xf]
    %v938 = vld [vmem:[%s4 + $0x30] sm:$0xf]
    %v939 = vld [vmem:[%s4 + $0x34] sm:$0xf]
    %v940 = vld [vmem:[%s4 + $0x38] sm:$0xf]
    %v941 = vld [vmem:[%s4 + $0x3c] sm:$0xf]
    %v942 = vld [vmem:[#allocation2] sm:$0x1]
    %v944 = vlaneseq
    %v945 = vshrl.u32 %v944, 7
    %v946 = vsub.s32 0, %v945
    %v947 = vrot.slane %v942, %v946
    %v965 = vunpack.c.l.b16 %v926
    %v966 = vunpack.c.l.b16 %v927
    %v967 = vunpack.c.l.b16 %v928
    %v968 = vunpack.c.l.b16 %v929
    %v969 = vunpack.c.l.b16 %v930
    %v970 = vunpack.c.l.b16 %v931
    %v971 = vunpack.c.l.b16 %v932
    %v972 = vunpack.c.l.b16 %v933
    %v973 = vunpack.c.l.b16 %v934
    %v974 = vunpack.c.l.b16 %v935
    %v975 = vunpack.c.l.b16 %v936
    %v976 = vunpack.c.l.b16 %v937
    %v977 = vunpack.c.l.b16 %v938
    %v978 = vunpack.c.l.b16 %v939
    %v979 = vunpack.c.l.b16 %v940
    %v980 = vunpack.c.l.b16 %v941
    %v981 = vpack.c.b16 %v966, %v965
    %v982 = vpack.c.b16 %v968, %v967
    %v983 = vpack.c.b16 %v970, %v969
    %v984 = vpack.c.b16 %v972, %v971
    %v985 = vpack.c.b16 %v974, %v973
    %v986 = vpack.c.b16 %v976, %v975
    %v987 = vpack.c.b16 %v978, %v977
    %v988 = vpack.c.b16 %v980, %v979
    %997 = vmatprep.subr.bf16.mxu0 0
    %998 = vmatpush1.bf16.msra.mxu0 %v981
    %999 = vmatprep.subr.bf16.mxu0 0
    %1000 = vmatpush1.bf16.msra.mxu0 %v982
    %1001 = vmatprep.subr.bf16.mxu0 0
    %1002 = vmatpush1.bf16.msra.mxu0 %v983
    %1003 = vmatprep.subr.bf16.mxu0 0
    %1004 = vmatpush1.bf16.msra.mxu0 %v984
    %1005 = vmatprep.subr.bf16.mxu0 0
    %1006 = vmatpush1.bf16.msra.mxu0 %v985
    %1007 = vmatprep.subr.bf16.mxu0 0
    %1008 = vmatpush1.bf16.msra.mxu0 %v986
    %1009 = vmatprep.subr.bf16.mxu0 0
    %1010 = vmatpush1.bf16.msra.mxu0 %v987
    %1011 = vmatprep.subr.bf16.mxu0 0
    %1012 = vmatpush1.bf16.msra.mxu0 %v988
    %1013 = vmatprep.subr.bf16.mxu0 0
    %1014 = vmatpush1.bf16.msra.mxu0 0
    %1015 = vmatprep.subr.bf16.mxu0 0
    %1016 = vmatpush1.bf16.msra.mxu0 0
    %1017 = vmatprep.subr.bf16.mxu0 0
    %1018 = vmatpush1.bf16.msra.mxu0 0
    %1019 = vmatprep.subr.bf16.mxu0 0
    %1020 = vmatpush1.bf16.msra.mxu0 0
    %1021 = vmatprep.subr.bf16.mxu0 0
    %1022 = vmatpush1.bf16.msra.mxu0 0
    %1023 = vmatprep.subr.bf16.mxu0 0
    %1024 = vmatpush1.bf16.msra.mxu0 0
    %1025 = vmatprep.subr.bf16.mxu0 0
    %1026 = vmatpush1.bf16.msra.mxu0 0
    %1027 = vmatprep.subr.bf16.mxu0 0
    %1028 = vmatpush1.bf16.msra.mxu0 0
    %1029 = vmatprep.mubr.bf16.mxu0 0
    %1030 = vmatmul.mubr.bf16.gmra.mrb[0].mxu0 %v925
    %v1031 = vpop.f32.mrb[0].mxu0
    %v1032 = vadd.f32 %v947, %v1031
    %v1033 = vpop.f32.mrb[0].mxu0
    %v1034 = vpop.f32.mrb[0].mxu0
    %v1035 = vpop.f32.mrb[0].mxu0
    %1036 = vdwg.mxu0
    %s1037 = scalar_lea.vmem [#allocation4], 448
    %v1038 = vld [vmem:[%s1037] sm:$0xf]
    %v1039 = vld [vmem:[%s1037 + $0x4] sm:$0xf]
    %v1040 = vld [vmem:[%s1037 + $0x8] sm:$0xf]
    %v1041 = vld [vmem:[%s1037 + $0xc] sm:$0xf]
    %v1042 = vld [vmem:[%s1037 + $0x10] sm:$0xf]
    %v1043 = vld [vmem:[%s1037 + $0x14] sm:$0xf]
    %v1044 = vld [vmem:[%s1037 + $0x18] sm:$0xf]
    %v1045 = vld [vmem:[%s1037 + $0x1c] sm:$0xf]
    %v1046 = vld [vmem:[%s1037 + $0x20] sm:$0xf]
    %v1047 = vld [vmem:[%s1037 + $0x24] sm:$0xf]
    %v1048 = vld [vmem:[%s1037 + $0x28] sm:$0xf]
    %v1049 = vld [vmem:[%s1037 + $0x2c] sm:$0xf]
    %v1050 = vld [vmem:[%s1037 + $0x30] sm:$0xf]
    %v1051 = vld [vmem:[%s1037 + $0x34] sm:$0xf]
    %v1052 = vld [vmem:[%s1037 + $0x38] sm:$0xf]
    %v1053 = vld [vmem:[%s1037 + $0x3c] sm:$0xf]
    %v1054 = vld [vmem:[%s3 + $0x8] sm:$0x1]
    %v1055 = vlaneseq
    %v1056 = vshrl.u32 %v1055, 7
    %v1057 = vsub.s32 0, %v1056
    %v1058 = vrot.slane %v1054, %v1057
    %v1075 = vunpack.c.l.b16 %v1038
    %v1076 = vunpack.c.l.b16 %v1039
    %v1077 = vunpack.c.l.b16 %v1040
    %v1078 = vunpack.c.l.b16 %v1041
    %v1079 = vunpack.c.l.b16 %v1042
    %v1080 = vunpack.c.l.b16 %v1043
    %v1081 = vunpack.c.l.b16 %v1044
    %v1082 = vunpack.c.l.b16 %v1045
    %v1083 = vunpack.c.l.b16 %v1046
    %v1084 = vunpack.c.l.b16 %v1047
    %v1085 = vunpack.c.l.b16 %v1048
    %v1086 = vunpack.c.l.b16 %v1049
    %v1087 = vunpack.c.l.b16 %v1050
    %v1088 = vunpack.c.l.b16 %v1051
    %v1089 = vunpack.c.l.b16 %v1052
    %v1090 = vunpack.c.l.b16 %v1053
    %v1091 = vpack.c.b16 %v1076, %v1075
    %v1092 = vpack.c.b16 %v1078, %v1077
    %v1093 = vpack.c.b16 %v1080, %v1079
    %v1094 = vpack.c.b16 %v1082, %v1081
    %v1095 = vpack.c.b16 %v1084, %v1083
    %v1096 = vpack.c.b16 %v1086, %v1085
    %v1097 = vpack.c.b16 %v1088, %v1087
    %v1098 = vpack.c.b16 %v1090, %v1089
    %1107 = vmatprep.subr.bf16.mxu0 0
    %1108 = vmatpush1.bf16.msra.mxu0 %v1091
    %1109 = vmatprep.subr.bf16.mxu0 0
    %1110 = vmatpush1.bf16.msra.mxu0 %v1092
    %1111 = vmatprep.subr.bf16.mxu0 0
    %1112 = vmatpush1.bf16.msra.mxu0 %v1093
    %1113 = vmatprep.subr.bf16.mxu0 0
    %1114 = vmatpush1.bf16.msra.mxu0 %v1094
    %1115 = vmatprep.subr.bf16.mxu0 0
    %1116 = vmatpush1.bf16.msra.mxu0 %v1095
    %1117 = vmatprep.subr.bf16.mxu0 0
    %1118 = vmatpush1.bf16.msra.mxu0 %v1096
    %1119 = vmatprep.subr.bf16.mxu0 0
    %1120 = vmatpush1.bf16.msra.mxu0 %v1097
    %1121 = vmatprep.subr.bf16.mxu0 0
    %1122 = vmatpush1.bf16.msra.mxu0 %v1098
    %1123 = vmatprep.subr.bf16.mxu0 0
    %1124 = vmatpush1.bf16.msra.mxu0 0
    %1125 = vmatprep.subr.bf16.mxu0 0
    %1126 = vmatpush1.bf16.msra.mxu0 0
    %1127 = vmatprep.subr.bf16.mxu0 0
    %1128 = vmatpush1.bf16.msra.mxu0 0
    %1129 = vmatprep.subr.bf16.mxu0 0
    %1130 = vmatpush1.bf16.msra.mxu0 0
    %1131 = vmatprep.subr.bf16.mxu0 0
    %1132 = vmatpush1.bf16.msra.mxu0 0
    %1133 = vmatprep.subr.bf16.mxu0 0
    %1134 = vmatpush1.bf16.msra.mxu0 0
    %1135 = vmatprep.subr.bf16.mxu0 0
    %1136 = vmatpush1.bf16.msra.mxu0 0
    %1137 = vmatprep.subr.bf16.mxu0 0
    %1138 = vmatpush1.bf16.msra.mxu0 0
    %1139 = vmatprep.mubr.bf16.mxu0 0
    %1140 = vmatmul.mubr.bf16.gmra.mrb[0].mxu0 %v925
    %v1141 = vpop.f32.mrb[0].mxu0
    %v1142 = vadd.f32 %v1058, %v1141
    %v1143 = vpop.f32.mrb[0].mxu0
    %v1144 = vpop.f32.mrb[0].mxu0
    %v1145 = vpop.f32.mrb[0].mxu0
    %1146 = vdwg.mxu0
    %v1147 = vmax.f32 %v1142, 0.0
    %v1148 = vpack.c.bf16 %v1147, %v1147
    %v1149 = vld [vmem:[%s6] sm:$0xf]
    %v1150 = vld [vmem:[%s6 + $0x4] sm:$0xf]
    %v1151 = vld [vmem:[%s6 + $0x8] sm:$0xf]
    %v1152 = vld [vmem:[%s6 + $0xc] sm:$0xf]
    %v1153 = vld [vmem:[%s6 + $0x10] sm:$0xf]
    %v1154 = vld [vmem:[%s6 + $0x14] sm:$0xf]
    %v1155 = vld [vmem:[%s6 + $0x18] sm:$0xf]
    %v1156 = vld [vmem:[%s6 + $0x1c] sm:$0xf]
    %v1157 = vld [vmem:[%s6 + $0x20] sm:$0xf]
    %v1158 = vld [vmem:[%s6 + $0x24] sm:$0xf]
    %v1159 = vld [vmem:[%s6 + $0x28] sm:$0xf]
    %v1160 = vld [vmem:[%s6 + $0x2c] sm:$0xf]
    %v1161 = vld [vmem:[%s6 + $0x30] sm:$0xf]
    %v1162 = vld [vmem:[%s6 + $0x34] sm:$0xf]
    %v1163 = vld [vmem:[%s6 + $0x38] sm:$0xf]
    %v1164 = vld [vmem:[%s6 + $0x3c] sm:$0xf]
    %v1165 = vld [vmem:[#allocation3] sm:$0x1]
    %v1167 = vlaneseq
    %v1168 = vshrl.u32 %v1167, 7
    %v1169 = vsub.s32 0, %v1168
    %v1170 = vrot.slane %v1165, %v1169
    %v1188 = vunpack.c.l.b16 %v1149
    %v1189 = vunpack.c.l.b16 %v1150
    %v1190 = vunpack.c.l.b16 %v1151
    %v1191 = vunpack.c.l.b16 %v1152
    %v1192 = vunpack.c.l.b16 %v1153
    %v1193 = vunpack.c.l.b16 %v1154
    %v1194 = vunpack.c.l.b16 %v1155
    %v1195 = vunpack.c.l.b16 %v1156
    %v1196 = vunpack.c.l.b16 %v1157
    %v1197 = vunpack.c.l.b16 %v1158
    %v1198 = vunpack.c.l.b16 %v1159
    %v1199 = vunpack.c.l.b16 %v1160
    %v1200 = vunpack.c.l.b16 %v1161
    %v1201 = vunpack.c.l.b16 %v1162
    %v1202 = vunpack.c.l.b16 %v1163
    %v1203 = vunpack.c.l.b16 %v1164
    %v1204 = vpack.c.b16 %v1189, %v1188
    %v1205 = vpack.c.b16 %v1191, %v1190
    %v1206 = vpack.c.b16 %v1193, %v1192
    %v1207 = vpack.c.b16 %v1195, %v1194
    %v1208 = vpack.c.b16 %v1197, %v1196
    %v1209 = vpack.c.b16 %v1199, %v1198
    %v1210 = vpack.c.b16 %v1201, %v1200
    %v1211 = vpack.c.b16 %v1203, %v1202
    %1220 = vmatprep.subr.bf16.mxu0 0
    %1221 = vmatpush1.bf16.msra.mxu0 %v1204
    %1222 = vmatprep.subr.bf16.mxu0 0
    %1223 = vmatpush1.bf16.msra.mxu0 %v1205
    %1224 = vmatprep.subr.bf16.mxu0 0
    %1225 = vmatpush1.bf16.msra.mxu0 %v1206
    %1226 = vmatprep.subr.bf16.mxu0 0
    %1227 = vmatpush1.bf16.msra.mxu0 %v1207
    %1228 = vmatprep.subr.bf16.mxu0 0
    %1229 = vmatpush1.bf16.msra.mxu0 %v1208
    %1230 = vmatprep.subr.bf16.mxu0 0
    %1231 = vmatpush1.bf16.msra.mxu0 %v1209
    %1232 = vmatprep.subr.bf16.mxu0 0
    %1233 = vmatpush1.bf16.msra.mxu0 %v1210
    %1234 = vmatprep.subr.bf16.mxu0 0
    %1235 = vmatpush1.bf16.msra.mxu0 %v1211
    %1236 = vmatprep.subr.bf16.mxu0 0
    %1237 = vmatpush1.bf16.msra.mxu0 0
    %1238 = vmatprep.subr.bf16.mxu0 0
    %1239 = vmatpush1.bf16.msra.mxu0 0
    %1240 = vmatprep.subr.bf16.mxu0 0
    %1241 = vmatpush1.bf16.msra.mxu0 0
    %1242 = vmatprep.subr.bf16.mxu0 0
    %1243 = vmatpush1.bf16.msra.mxu0 0
    %1244 = vmatprep.subr.bf16.mxu0 0
    %1245 = vmatpush1.bf16.msra.mxu0 0
    %1246 = vmatprep.subr.bf16.mxu0 0
    %1247 = vmatpush1.bf16.msra.mxu0 0
    %1248 = vmatprep.subr.bf16.mxu0 0
    %1249 = vmatpush1.bf16.msra.mxu0 0
    %1250 = vmatprep.subr.bf16.mxu0 0
    %1251 = vmatpush1.bf16.msra.mxu0 0
    %1252 = vmatprep.mubr.bf16.mxu0 0
    %1253 = vmatmul.mubr.bf16.gmra.mrb[0].mxu0 %v1148
    %v1254 = vpop.f32.mrb[0].mxu0
    %v1255 = vadd.f32 %v1170, %v1254
    %v1256 = vpop.f32.mrb[0].mxu0
    %v1257 = vpop.f32.mrb[0].mxu0
    %v1258 = vpop.f32.mrb[0].mxu0
    %1259 = vdwg.mxu0
    %1261 = vrot.lane.b32.xlu0 %v1032, 1
    %v1262 = vpop.permute.xlu0 %1261
    %vm1264 = vcmask 7168
    %v1265 = vsel %vm1264, %v1255, %v1262
    %vm1266 = vcmask 15360
    %1267 = vst.msk [vmem:[%s8] sm:$0xff] %vm1266, %v1265
    // Predicated region
    $region38: #{tpu_custom_call.1} parent=1 // pred_check
      _
    $region39: #{tpu_custom_call.1} parent=1 // pred_check_branch
      %1269 = sbr.rel (0) target = $region41
    $region40: #{tpu_custom_call.1} parent=1 // pred_region
      _
    $region41: #{tpu_custom_call.1} parent=1 // pred_fallthru
      _
    // Predicated region
    $region42: #{tpu_custom_call.1} parent=1 // pred_check
      _
    $region43: #{tpu_custom_call.1} parent=1 // pred_check_branch
      %1271 = sbr.rel (0) target = $region45
    $region44: #{tpu_custom_call.1} parent=1 // pred_region
      _
    $region45: #{tpu_custom_call.1} parent=1 // pred_fallthru
      _
    %1272 = vsyncpa [#allocation5], 1

</llo_original>
